<compile_context>
chip_gen: v6e
topology: v6e:2x2x1
jax: 0.10.0
libtpu: 0.0.40
codegen_flags: <defaults>
</compile_context>

<pallas_src>
import jax
import jax.numpy as jnp
from jax.experimental import pallas as pl
from jax.experimental.pallas import tpu as pltpu

LANES = 128
ACC_ROWS = 8            # sublane height of the vector accumulators
CHUNK_ROWS = 128        # in-kernel accumulation chunk (keeps temporaries ~16 vregs)
MAX_BLOCK_ROWS = 2048   # per-grid-step row cap (amortizes ~0.35us/step overhead)
VMEM_INPUT_BUDGET = 8 * 1024 * 1024  # double-buffered inputs; fits v5e's 16 MiB default


def _pick_block_rows(H, W, x_dtype, t_dtype):
    """Largest legal H-block that keeps double-buffered inputs inside the VMEM budget."""
    w_pad = -(-W // LANES) * LANES  # VMEM pads the minor dim to 128 lanes
    per_row = 2 * w_pad * (jnp.dtype(x_dtype).itemsize + jnp.dtype(t_dtype).itemsize)
    budget_rows = max(ACC_ROWS, VMEM_INPUT_BUDGET // per_row)
    cap = min(MAX_BLOCK_ROWS, budget_rows)
    if H <= cap:
        return H                       # one block spans all rows of a batch item
    blk = (cap // CHUNK_ROWS) * CHUNK_ROWS
    if blk == 0:
        blk = max(ACC_ROWS, (cap // ACC_ROWS) * ACC_ROWS)
    return blk


def _make_kernel(H, W, block_rows, chunk_rows, sub, need_mask):
    """Builds the fused kernel, specialized on static shapes."""
    n_chunks = block_rows // chunk_rows

    if chunk_rows % ACC_ROWS == 0:
        # (chunk_rows, W) -> (8, W): sublane-group adds, pure VPU, no XLU.
        def fold(v):
            return v.reshape(chunk_rows // ACC_ROWS, ACC_ROWS, W).sum(axis=0)
    else:
        # Odd-height single block (small H not divisible by 8): sublane reduce.
        def fold(v):
            return v.sum(axis=0, keepdims=True)

    def kernel(x_ref, t_ref, out_ref):
        # The output block is resident across the H-block axis for the current batch
        # index; zero it on first visit.
        @pl.when(pl.program_id(1) == 0)
        def _():
            out_ref[...] = jnp.zeros_like(out_ref)

        if need_mask:
            rows_valid = H - pl.program_id(1) * block_rows  # >= 1 by construction

        acc_t = jnp.zeros((sub, W), jnp.float32)
        acc_l = jnp.zeros((sub, W), jnp.float32)
        acc_tl = jnp.zeros((sub, W), jnp.float32)

        # Static unroll (n_chunks <= MAX_BLOCK_ROWS / CHUNK_ROWS = 16); static slices.
        for c in range(n_chunks):
            r0 = c * chunk_rows
            x = x_ref[0, 0, r0:r0 + chunk_rows, :].astype(jnp.float32)
            t = t_ref[0, r0:r0 + chunk_rows, :].astype(jnp.float32)

            if need_mask:
                rid = jax.lax.broadcasted_iota(jnp.int32, (chunk_rows, W), 0) + r0
                m = rid < rows_valid
                # Zero x AND t before the clamped logs: out-of-range rows (garbage in
                # the ragged tail block) then contribute exactly 0 to every sum and
                # cannot produce NaNs.
                x = jnp.where(m, x, 0.0)
                t = jnp.where(m, t, 0.0)

            # PyTorch's binary_cross_entropy clamps each log term at -100.  The clamp
            # must stay BEFORE the multiply (padding-contributes-zero invariant).
            log_x = jnp.maximum(jnp.log(x), -100.0)
            log_1mx = jnp.maximum(jnp.log(1.0 - x), -100.0)
            l_elem = t * log_x + (1.0 - t) * log_1mx  # two logs: soft labels OK

            acc_t = acc_t + fold(t)
            acc_l = acc_l + fold(l_elem)
            acc_tl = acc_tl + fold(t * l_elem)

        out_ref[0, 0, :, :] += acc_t
        out_ref[0, 1, :, :] += acc_l
        out_ref[0, 2, :, :] += acc_tl

    return kernel


def weighted_bce_loss(inp, target):
    """Equivalent of WeightedBCELoss(size_average=True).forward(inp, target)."""
    B, C, H, W = inp.shape
    assert target.shape == (B, H, W), (inp.shape, target.shape)
    n_elems = B * H * W

    block_rows = _pick_block_rows(H, W, inp.dtype, target.dtype)
    n_h_blocks = -(-H // block_rows)
    need_mask = (H % block_rows) != 0
    if block_rows <= CHUNK_ROWS or (block_rows % CHUNK_ROWS) != 0:
        chunk_rows = block_rows
    else:
        chunk_rows = CHUNK_ROWS
    sub = ACC_ROWS if (chunk_rows % ACC_ROWS == 0) else 1

    kernel = _make_kernel(H, W, block_rows, chunk_rows, sub, need_mask)

    # TODO(synk): for tiny H*W with very large B, additionally block over the batch
    # axis to keep per-step DMA large; not needed at the shapes exercised here.
    partials = pl.pallas_call(
        kernel,
        out_shape=jax.ShapeDtypeStruct((B, 3, sub, W), jnp.float32),
        grid_spec=pltpu.PrefetchScalarGridSpec(
            num_scalar_prefetch=0,
            grid=(B, n_h_blocks),
            in_specs=[
                # NCHW input: pin channel block 0, tile H.
                pl.BlockSpec((1, 1, block_rows, W), lambda b, h: (b, 0, h, 0)),
                # NHW target at native dtype: tile H.
                pl.BlockSpec((1, block_rows, W), lambda b, h: (b, h, 0)),
            ],
            out_specs=pl.BlockSpec((1, 3, sub, W), lambda b, h: (b, 0, 0, 0)),
        ),
        compiler_params=pltpu.CompilerParams(
            dimension_semantics=("parallel", "arbitrary")),
    )(inp, target)

    sums = jnp.sum(partials, axis=(0, 2, 3))  # (3,): [S_t, L1, L2]
    n_f = jnp.float32(n_elems)
    beta = 1.0 - sums[0] / n_f
    total = -((1.0 - beta) * sums[1] + (2.0 * beta - 1.0) * sums[2])
    return total / n_f


def _reference_loss(inp, target):
    t = target.astype(jnp.float32)
    beta = 1.0 - jnp.mean(t)
    x = inp[:, 0, :, :].astype(jnp.float32)
    w = 1.0 - beta + (2.0 * beta - 1.0) * t
    loss = -w * (t * jnp.maximum(jnp.log(x), -100.0)
                 + (1.0 - t) * jnp.maximum(jnp.log(1.0 - x), -100.0))
    return jnp.mean(loss)


if __name__ == "__main__":
    key = jax.random.PRNGKey(0)
    k1, k2 = jax.random.split(key)
    # input must be probabilities (as F.binary_cross_entropy expects)
    inp = jax.nn.sigmoid(jax.random.normal(k1, (2, 4, 16, 16), dtype=jnp.float32))
    target = (jax.random.uniform(k2, (2, 16, 16)) < 0.5).astype(jnp.float32)

    out = jax.block_until_ready(weighted_bce_loss(inp, target))
    ref = jax.block_until_ready(_reference_loss(inp, target))
    assert abs(float(out) - float(ref)) < 1e-4, (float(out), float(ref))

    print("KERNEL_OK")
</pallas_src>

<mosaic_0001>
module attributes {stable_mosaic.version = 11 : i64} {
  func.func @kernel(%arg0: i32, %arg1: i32, %arg2: memref<1x1x16x16xf32, #tpu.memory_space<vmem>>, %arg3: memref<1x16x16xf32, #tpu.memory_space<vmem>>, %arg4: memref<1x3x8x16xf32, #tpu.memory_space<vmem>>) attributes {dimension_semantics = [#tpu.dimension_semantics<parallel>, #tpu.dimension_semantics<arbitrary>], iteration_bounds = array<i64: 2, 1>, scalar_prefetch = 0 : i64, scratch_operands = 0 : i64, tpu.core_type = #tpu.core_type<tc>, window_params = [{transform_indices = @transform_0, window_bounds = array<i64: 1, 1, 16, 16>}, {transform_indices = @transform_1, window_bounds = array<i64: 1, 16, 16>}, {transform_indices = @transform_2, window_bounds = array<i64: 1, 3, 8, 16>}]} {
    %c0_i32 = arith.constant 0 : i32
    %0 = arith.cmpi eq, %arg1, %c0_i32 : i32
    %1 = arith.extui %0 : i1 to i32
    %c0_i32_0 = arith.constant 0 : i32
    %2 = arith.cmpi ne, %1, %c0_i32_0 : i32
    scf.if %2 {
      %cst_38 = arith.constant 0.000000e+00 : f32
      %51 = vector.broadcast %cst_38 : f32 to vector<1x3x8x16xf32>
      %c0_39 = arith.constant 0 : index
      %c0_40 = arith.constant 0 : index
      %c0_41 = arith.constant 0 : index
      %c0_42 = arith.constant 0 : index
      %52 = vector.load %arg4[%c0_39, %c0_40, %c0_41, %c0_42] : memref<1x3x8x16xf32, #tpu.memory_space<vmem>>, vector<1x3x8x16xf32>
      tpu.vector_store %arg4[%c0_39, %c0_40, %c0_41, %c0_42], %51 {strides = array<i32>} : memref<1x3x8x16xf32, #tpu.memory_space<vmem>>, vector<1x3x8x16xf32>,
    } else {
    }
    %cst = arith.constant 0.000000e+00 : f32
    %3 = vector.broadcast %cst : f32 to vector<8x16xf32>
    %cst_1 = arith.constant 0.000000e+00 : f32
    %4 = vector.broadcast %cst_1 : f32 to vector<8x16xf32>
    %cst_2 = arith.constant 0.000000e+00 : f32
    %5 = vector.broadcast %cst_2 : f32 to vector<8x16xf32>
    %c0 = arith.constant 0 : index
    %c0_3 = arith.constant 0 : index
    %c0_4 = arith.constant 0 : index
    %c0_5 = arith.constant 0 : index
    %6 = vector.load %arg2[%c0, %c0_3, %c0_4, %c0_5] : memref<1x1x16x16xf32, #tpu.memory_space<vmem>>, vector<1x1x16x16xf32>
    %7 = vector.shape_cast %6 : vector<1x1x16x16xf32> to vector<16x16xf32>
    %c0_6 = arith.constant 0 : index
    %c0_7 = arith.constant 0 : index
    %c0_8 = arith.constant 0 : index
    %8 = vector.load %arg3[%c0_6, %c0_7, %c0_8] : memref<1x16x16xf32, #tpu.memory_space<vmem>>, vector<1x16x16xf32>
    %9 = vector.shape_cast %8 : vector<1x16x16xf32> to vector<16x16xf32>
    %10 = math.log %7 : vector<16x16xf32>
    %cst_9 = arith.constant -1.000000e+02 : f32
    %11 = vector.broadcast %cst_9 : f32 to vector<16x16xf32>
    %12 = arith.maximumf %10, %11 : vector<16x16xf32>
    %cst_10 = arith.constant 1.000000e+00 : f32
    %13 = vector.broadcast %cst_10 : f32 to vector<16x16xf32>
    %14 = arith.subf %13, %7 : vector<16x16xf32>
    %15 = math.log %14 : vector<16x16xf32>
    %cst_11 = arith.constant -1.000000e+02 : f32
    %16 = vector.broadcast %cst_11 : f32 to vector<16x16xf32>
    %17 = arith.maximumf %15, %16 : vector<16x16xf32>
    %18 = arith.mulf %9, %12 : vector<16x16xf32>
    %cst_12 = arith.constant 1.000000e+00 : f32
    %19 = vector.broadcast %cst_12 : f32 to vector<16x16xf32>
    %20 = arith.subf %19, %9 : vector<16x16xf32>
    %21 = arith.mulf %20, %17 : vector<16x16xf32>
    %22 = arith.addf %18, %21 : vector<16x16xf32>
    %23 = vector.shape_cast %9 : vector<16x16xf32> to vector<2x8x16xf32>
    %cst_13 = arith.constant dense<0.000000e+00> : vector<8x16xf32>
    %24 = vector.multi_reduction <add>, %23, %cst_13 [0] : vector<2x8x16xf32> to vector<8x16xf32>
    %25 = arith.addf %3, %24 : vector<8x16xf32>
    %26 = vector.shape_cast %22 : vector<16x16xf32> to vector<2x8x16xf32>
    %cst_14 = arith.constant dense<0.000000e+00> : vector<8x16xf32>
    %27 = vector.multi_reduction <add>, %26, %cst_14 [0] : vector<2x8x16xf32> to vector<8x16xf32>
    %28 = arith.addf %4, %27 : vector<8x16xf32>
    %29 = arith.mulf %9, %22 : vector<16x16xf32>
    %30 = vector.shape_cast %29 : vector<16x16xf32> to vector<2x8x16xf32>
    %cst_15 = arith.constant dense<0.000000e+00> : vector<8x16xf32>
    %31 = vector.multi_reduction <add>, %30, %cst_15 [0] : vector<2x8x16xf32> to vector<8x16xf32>
    %32 = arith.addf %5, %31 : vector<8x16xf32>
    %c0_16 = arith.constant 0 : index
    %c0_17 = arith.constant 0 : index
    %c0_18 = arith.constant 0 : index
    %c0_19 = arith.constant 0 : index
    %33 = vector.load %arg4[%c0_16, %c0_17, %c0_18, %c0_19] : memref<1x3x8x16xf32, #tpu.memory_space<vmem>>, vector<1x1x8x16xf32>
    %34 = vector.shape_cast %33 : vector<1x1x8x16xf32> to vector<8x16xf32>
    %35 = arith.addf %34, %25 : vector<8x16xf32>
    %c0_20 = arith.constant 0 : index
    %c0_21 = arith.constant 0 : index
    %c0_22 = arith.constant 0 : index
    %c0_23 = arith.constant 0 : index
    %36 = vector.load %arg4[%c0_20, %c0_21, %c0_22, %c0_23] : memref<1x3x8x16xf32, #tpu.memory_space<vmem>>, vector<1x1x8x16xf32>
    %37 = vector.shape_cast %36 : vector<1x1x8x16xf32> to vector<8x16xf32>
    %38 = vector.shape_cast %35 : vector<8x16xf32> to vector<1x1x8x16xf32>
    tpu.vector_store %arg4[%c0_20, %c0_21, %c0_22, %c0_23], %38 {strides = array<i32>} : memref<1x3x8x16xf32, #tpu.memory_space<vmem>>, vector<1x1x8x16xf32>,
    %c0_24 = arith.constant 0 : index
    %c1 = arith.constant 1 : index
    %c0_25 = arith.constant 0 : index
    %c0_26 = arith.constant 0 : index
    %39 = vector.load %arg4[%c0_24, %c1, %c0_25, %c0_26] : memref<1x3x8x16xf32, #tpu.memory_space<vmem>>, vector<1x1x8x16xf32>
    %40 = vector.shape_cast %39 : vector<1x1x8x16xf32> to vector<8x16xf32>
    %41 = arith.addf %40, %28 : vector<8x16xf32>
    %c0_27 = arith.constant 0 : index
    %c1_28 = arith.constant 1 : index
    %c0_29 = arith.constant 0 : index
    %c0_30 = arith.constant 0 : index
    %42 = vector.load %arg4[%c0_27, %c1_28, %c0_29, %c0_30] : memref<1x3x8x16xf32, #tpu.memory_space<vmem>>, vector<1x1x8x16xf32>
    %43 = vector.shape_cast %42 : vector<1x1x8x16xf32> to vector<8x16xf32>
    %44 = vector.shape_cast %41 : vector<8x16xf32> to vector<1x1x8x16xf32>
    tpu.vector_store %arg4[%c0_27, %c1_28, %c0_29, %c0_30], %44 {strides = array<i32>} : memref<1x3x8x16xf32, #tpu.memory_space<vmem>>, vector<1x1x8x16xf32>,
    %c0_31 = arith.constant 0 : index
    %c2 = arith.constant 2 : index
    %c0_32 = arith.constant 0 : index
    %c0_33 = arith.constant 0 : index
    %45 = vector.load %arg4[%c0_31, %c2, %c0_32, %c0_33] : memref<1x3x8x16xf32, #tpu.memory_space<vmem>>, vector<1x1x8x16xf32>
    %46 = vector.shape_cast %45 : vector<1x1x8x16xf32> to vector<8x16xf32>
    %47 = arith.addf %46, %32 : vector<8x16xf32>
    %c0_34 = arith.constant 0 : index
    %c2_35 = arith.constant 2 : index
    %c0_36 = arith.constant 0 : index
    %c0_37 = arith.constant 0 : index
    %48 = vector.load %arg4[%c0_34, %c2_35, %c0_36, %c0_37] : memref<1x3x8x16xf32, #tpu.memory_space<vmem>>, vector<1x1x8x16xf32>
    %49 = vector.shape_cast %48 : vector<1x1x8x16xf32> to vector<8x16xf32>
    %50 = vector.shape_cast %47 : vector<8x16xf32> to vector<1x1x8x16xf32>
    tpu.vector_store %arg4[%c0_34, %c2_35, %c0_36, %c0_37], %50 {strides = array<i32>} : memref<1x3x8x16xf32, #tpu.memory_space<vmem>>, vector<1x1x8x16xf32>,
    return
  }
  func.func @transform_0(%arg0: i32, %arg1: i32) -> (i32, i32, i32, i32) {
    %c0_i32 = arith.constant 0 : i32
    %c0_i32_0 = arith.constant 0 : i32
    %c0_i32_1 = arith.constant 0 : i32
    return %arg0, %c0_i32, %arg1, %c0_i32_0 : i32, i32, i32, i32
  }
  func.func @transform_1(%arg0: i32, %arg1: i32) -> (i32, i32, i32) {
    %c0_i32 = arith.constant 0 : i32
    %c0_i32_0 = arith.constant 0 : i32
    return %arg0, %arg1, %c0_i32 : i32, i32, i32
  }
  func.func @transform_2(%arg0: i32, %arg1: i32) -> (i32, i32, i32, i32) {
    %c0_i32 = arith.constant 0 : i32
    %c0_i32_0 = arith.constant 0 : i32
    %c0_i32_1 = arith.constant 0 : i32
    %c0_i32_2 = arith.constant 0 : i32
    return %arg0, %c0_i32, %c0_i32_0, %c0_i32_1 : i32, i32, i32, i32
  }
}

</mosaic_0001>

<llo_original>
// kernel: tpu_custom_call.1
$region0: #{tpu_custom_call.1}
  #allocation0 [shape = 'u32[]', space=smem, size = 0x4, offset = 0x4, fixed_abs, tag = 'smem constant byte address 0x4 - core index']
  #allocation1 [shape = 'u32[144,128]{1,0:T(1,128)}', space=vmem, size = 0x12000, scoped, tag = 'internal scratch']
  %s0 = inlined_call_operand.hbm [shape: f32[2,4,16,16], index: 0, kind: input, shape index: {}]
  %s1 = inlined_call_operand.hbm [shape: f32[2,16,16], index: 1, kind: input, shape index: {}]
  %s2 = inlined_call_operand.hbm [shape: f32[2,3,8,16], index: 2, kind: output, shape index: {}]
  %s3 = sld [smem:[#allocation0]]
  $region53: #{tpu_custom_call.1} parent=0
    _
  %s5 = ssub.s32 1, %s3
  %s6 = scalar_select 0, %s5, %s3
  $region1: #{tpu_custom_call.1} parent=0
    #allocation2 [shape = 'u8[16384]{0}', space=vmem, size = 0x4000, scoped, tag = 'input window, operand 0']
    #allocation3 [shape = 's32[2]{0}', space=sflag, size = 0x8, scoped, tag = 'scoped memory for tpu_custom_call.1']
    #allocation4 [shape = 's32[2]{0}', space=sflag, size = 0x8, scoped, tag = 'scoped memory for tpu_custom_call.1']
    #allocation5 [shape = 'u8[16384]{0}', space=vmem, size = 0x4000, scoped, tag = 'input window, operand 1']
    #allocation6 [shape = 's32[2]{0}', space=sflag, size = 0x8, scoped, tag = 'scoped memory for tpu_custom_call.1']
    #allocation7 [shape = 'u8[24576]{0}', space=vmem, size = 0x6000, scoped, tag = 'output window, operand 0']
    %7 = vsyncpa [#allocation3], 0
    %s8 = scalar_lea.sflag [#allocation3], 1
    %9 = vsyncpa %s8, 0
    %10 = vsyncpa [#allocation6], 0
    %s11 = scalar_lea.sflag [#allocation6], 1
    %12 = vsyncpa %s11, 0
    %13 = vsyncpa [#allocation4], 0
    %s14 = scalar_lea.sflag [#allocation4], 1
    %15 = vsyncpa %s14, 0
    loop: start=0, step=1, limit=4
    $region2: #{tpu_custom_call.1} parent=1 // loop_pre_header
      _
    $region3: #{tpu_custom_call.1} parent=1 // loop_header
      %s17 = sphi 0, %s21
      %p18 = scmp.ge.s32.totalorder %s17, 4
      %s24 = sphi 0, %s36
      %s25 = sphi 0, %s32
      %s26 = sphi 0, %s24
      %s27 = sphi 0, %s25
      %s28 = sphi 0, %s26
      %s29 = sphi 0, %s27
      %s41 = sphi 0, %s43
      %s44 = sphi 0, %s41
      %s45 = sphi 0, %s44
      %s61 = sphi 0, %s45
      %s69 = sphi 0, %s71
      %s72 = sphi 0, %s69
      %s73 = sphi 0, %s72
      %s89 = sphi 0, %s73
      %s95 = sphi 0, %s97
      %s98 = sphi 0, %s95
      %s99 = sphi 0, %s98
      %s115 = sphi 0, %s99
    $region4: #{tpu_custom_call.1} parent=1 // loop_header_branch
      %20 = sbr.rel (%p18) target = $region8
    $region5: #{tpu_custom_call.1} parent=1 // loop_body
      %s22 = ssub.s32 %s17, 1
      %s23 = ssub.s32 %s17, 2
      %s30 = sadd.s32 1, %s25
      %p31 = scmp.ge.s32.totalorder %s30, 1
      %s32 = scalar_select %p31, 0, %s30
      %s33 = sadd.s32 1, %s24
      %s34 = scalar_select %p31, %s33, %s24
      %p35 = scmp.ge.s32.totalorder %s34, 2
      %s36 = scalar_select %p35, 0, %s34
      %s37 = ssub.s32 %s24, %s36
      %s38 = ssub.s32 %s25, %s32
      %s39 = sor.u32 %s37, %s38
      %p40 = scmp.eq.s32.totalorder %s39, 0
      %s42 = sadd.s32 %s41, 1
      %s43 = scalar_select %p40, %s41, %s42
      %p46 = pneg %p40
      %p47 = scmp.eq.s32.totalorder %s17, 1
      %p48 = por %p46, %p47
      %p49 = scmp.ne.s32.totalorder %s41, %s44
      %p50 = scmp.eq.s32.totalorder %s17, 0
      %p51 = por %p49, %p50
      %p52 = scmp.ne.s32.totalorder %s41, %s44
      %p53 = scmp.eq.s32.totalorder %s22, 1
      %p54 = por %p52, %p53
      %p55 = scmp.ne.s32.totalorder %s44, %s45
      %p56 = scmp.eq.s32.totalorder %s22, 0
      %p57 = por %p55, %p56
      %p58 = scmp.ne.s32.totalorder %s44, %s45
      %p59 = scmp.eq.s32.totalorder %s23, 1
      %p60 = por %p58, %p59
      %p62 = scmp.ne.s32.totalorder %s45, %s61
      %p63 = scmp.eq.s32.totalorder %s23, 0
      %p64 = por %p62, %p63
      %s65 = ssub.s32 %s24, %s36
      %s66 = ssub.s32 %s25, %s32
      %s67 = sor.u32 %s65, %s66
      %p68 = scmp.eq.s32.totalorder %s67, 0
      %s70 = sadd.s32 %s69, 1
      %s71 = scalar_select %p68, %s69, %s70
      %p74 = pneg %p68
      %p75 = scmp.eq.s32.totalorder %s17, 1
      %p76 = por %p74, %p75
      %p77 = scmp.ne.s32.totalorder %s69, %s72
      %p78 = scmp.eq.s32.totalorder %s17, 0
      %p79 = por %p77, %p78
      %p80 = scmp.ne.s32.totalorder %s69, %s72
      %p81 = scmp.eq.s32.totalorder %s22, 1
      %p82 = por %p80, %p81
      %p83 = scmp.ne.s32.totalorder %s72, %s73
      %p84 = scmp.eq.s32.totalorder %s22, 0
      %p85 = por %p83, %p84
      %p86 = scmp.ne.s32.totalorder %s72, %s73
      %p87 = scmp.eq.s32.totalorder %s23, 1
      %p88 = por %p86, %p87
      %p90 = scmp.ne.s32.totalorder %s73, %s89
      %p91 = scmp.eq.s32.totalorder %s23, 0
      %p92 = por %p90, %p91
      %s93 = ssub.s32 %s24, %s36
      %p94 = scmp.eq.s32.totalorder %s93, 0
      %s96 = sadd.s32 %s95, 1
      %s97 = scalar_select %p94, %s95, %s96
      %p100 = pneg %p94
      %p101 = scmp.eq.s32.totalorder %s17, 1
      %p102 = por %p100, %p101
      %p103 = scmp.ne.s32.totalorder %s95, %s98
      %p104 = scmp.eq.s32.totalorder %s17, 0
      %p105 = por %p103, %p104
      %p106 = scmp.ne.s32.totalorder %s95, %s98
      %p107 = scmp.eq.s32.totalorder %s22, 1
      %p108 = por %p106, %p107
      %p109 = scmp.ne.s32.totalorder %s98, %s99
      %p110 = scmp.eq.s32.totalorder %s22, 0
      %p111 = por %p109, %p110
      %p112 = scmp.ne.s32.totalorder %s98, %s99
      %p113 = scmp.eq.s32.totalorder %s23, 1
      %p114 = por %p112, %p113
      %p116 = scmp.ne.s32.totalorder %s99, %s115
      %p117 = scmp.eq.s32.totalorder %s23, 0
      %p118 = por %p116, %p117
      %p119 = scmp.le.s32.totalorder 1, %s17
      %p120 = scmp.lt.s32.totalorder %s17, 3
      %p121 = pnand %p119, %p120
      %p122 = pneg %p121
      // Predicated region
      $region9: #{tpu_custom_call.1} parent=5 // pred_check
        _
      $region10: #{tpu_custom_call.1} parent=5 // pred_check_branch
        %124 = sbr.rel (%p121) target = $region12
      $region11: #{tpu_custom_call.1} parent=5 // pred_region
        %s125 = ssub.s32 %s17, 1
      $region12: #{tpu_custom_call.1} parent=5 // pred_fallthru
        _
      %p126 = scmp.lt.s32.totalorder %s17, 2
      // Predicated region
      $region13: #{tpu_custom_call.1} parent=5 // pred_check
        %p127 = pneg %p126
      $region14: #{tpu_custom_call.1} parent=5 // pred_check_branch
        %129 = sbr.rel (%p127) target = $region16
      $region15: #{tpu_custom_call.1} parent=5 // pred_region
        // Predicated region
        $region17: #{tpu_custom_call.1} parent=15 // pred_check
          %p130 = pneg %p51
        $region18: #{tpu_custom_call.1} parent=15 // pred_check_branch
          %132 = sbr.rel (%p130) target = $region20
        $region19: #{tpu_custom_call.1} parent=15 // pred_region
          %s133 = sand.u32 %s41, 1
          %s134 = scalar_lea.sflag [#allocation3], %s133
          %s135 = sand.u32 %s41, 1
          %s136 = smul.addr %s135, 16
          %s137 = scalar_lea.vmem [#allocation2], %s136
          %s138 = smul.u32 2, %s25
          %s140 = ssub.s32 256, 256
          %141 = vsyncadd %s134, %s140
          %s142 = smul.addr %s24, 8
          %s143 = sadd.s32 %s138, %s142
          %s144 = smul.addr %s143, 128
          %s145 = scalar_lea.hbm %s0, %s144
          %s146 = sshll.u32 %s137, 4
          %s147 = int_to_ptr.vmem [resolvable:$true] %s146
          %152 = dma.hbm_to_vmem [thread:$0]  %s145, 256, %s147, %s134, 128, 128, 8
        $region20: #{tpu_custom_call.1} parent=15 // pred_fallthru
          _
        // Predicated region
        $region21: #{tpu_custom_call.1} parent=15 // pred_check
          %p153 = pneg %p79
        $region22: #{tpu_custom_call.1} parent=15 // pred_check_branch
          %155 = sbr.rel (%p153) target = $region24
        $region23: #{tpu_custom_call.1} parent=15 // pred_region
          %s156 = sand.u32 %s69, 1
          %s157 = scalar_lea.sflag [#allocation6], %s156
          %s158 = sand.u32 %s69, 1
          %s159 = smul.addr %s158, 16
          %s160 = scalar_lea.vmem [#allocation5], %s159
          %s161 = smul.u32 2, %s25
          %s163 = ssub.s32 256, 256
          %164 = vsyncadd %s157, %s163
          %s165 = smul.addr %s24, 2
          %s166 = sadd.s32 %s161, %s165
          %s167 = smul.addr %s166, 128
          %s168 = scalar_lea.hbm %s1, %s167
          %s169 = sshll.u32 %s160, 4
          %s170 = int_to_ptr.vmem [resolvable:$true] %s169
          %175 = dma.hbm_to_vmem [thread:$0]  %s168, 256, %s170, %s157, 128, 128, 8
        $region24: #{tpu_custom_call.1} parent=15 // pred_fallthru
          _
      $region16: #{tpu_custom_call.1} parent=5 // pred_fallthru
        _
      %p176 = scmp.le.s32.totalorder 1, %s17
      %p177 = scmp.lt.s32.totalorder %s17, 3
      %p178 = pnand %p176, %p177
      %p179 = pneg %p178
      // Predicated region
      $region25: #{tpu_custom_call.1} parent=5 // pred_check
        _
      $region26: #{tpu_custom_call.1} parent=5 // pred_check_branch
        %181 = sbr.rel (%p178) target = $region28
      $region27: #{tpu_custom_call.1} parent=5 // pred_region
        %s182 = ssub.s32 %s17, 1
        %s183 = sand.u32 %s44, 1
        %s184 = scalar_lea.sflag [#allocation3], %s183
        %s185 = sand.u32 %s44, 1
        %s186 = smul.addr %s185, 16
        %s187 = scalar_lea.vmem [#allocation2], %s186
        // Predicated region
        $region29: #{tpu_custom_call.1} parent=27 // pred_check
          %p188 = pneg %p57
        $region30: #{tpu_custom_call.1} parent=27 // pred_check_branch
          %190 = sbr.rel (%p188) target = $region32
        $region31: #{tpu_custom_call.1} parent=27 // pred_region
          %191 = dma.done %s184, 256
        $region32: #{tpu_custom_call.1} parent=27 // pred_fallthru
          _
        %s192 = sand.u32 %s72, 1
        %s193 = scalar_lea.sflag [#allocation6], %s192
        %s194 = sand.u32 %s72, 1
        %s195 = smul.addr %s194, 16
        %s196 = scalar_lea.vmem [#allocation5], %s195
        // Predicated region
        $region33: #{tpu_custom_call.1} parent=27 // pred_check
          %p197 = pneg %p85
        $region34: #{tpu_custom_call.1} parent=27 // pred_check_branch
          %199 = sbr.rel (%p197) target = $region36
        $region35: #{tpu_custom_call.1} parent=27 // pred_region
          %200 = dma.done %s193, 256
        $region36: #{tpu_custom_call.1} parent=27 // pred_fallthru
          _
        %s201 = sand.u32 %s44, 1
        %s202 = scalar_lea.sflag [#allocation3], %s201
        %s203 = sand.u32 %s44, 1
        %s204 = smul.addr %s203, 16
        %s205 = scalar_lea.vmem [#allocation2], %s204
        %p206 = pneg %p57
        %p207 = pneg %p54
        %s208 = sand.u32 %s72, 1
        %s209 = scalar_lea.sflag [#allocation6], %s208
        %s210 = sand.u32 %s72, 1
        %s211 = smul.addr %s210, 16
        %s212 = scalar_lea.vmem [#allocation5], %s211
        %p213 = pneg %p85
        %p214 = pneg %p82
        %p215 = pneg %p111
        %p216 = pneg %p108
        %s217 = sand.u32 %s98, 1
        %s218 = scalar_lea.sflag [#allocation4], %s217
        %s219 = sand.u32 %s98, 1
        %s220 = smul.addr %s219, 24
        %s221 = scalar_lea.vmem [#allocation7], %s220
        %s222 = smul.u32 2, %s27
        %s223 = smul.u32 2, %s27
        %p224 = scmp.eq.s32.totalorder %s27, 0
        // Predicated region
        $region37: #{tpu_custom_call.1} parent=27 // pred_check
          %p225 = pneg %p224
        $region38: #{tpu_custom_call.1} parent=27 // pred_check_branch
          %227 = sbr.rel (%p225) target = $region40
        $region39: #{tpu_custom_call.1} parent=27 // pred_region
          %vm228 = vcmask 130048
          %229 = vst.msk [vmem:[%s221] sm:$0xff] %vm228, 0.0
          %230 = vst.msk [vmem:[%s221 + $0x8] sm:$0xff] %vm228, 0.0
          %231 = vst.msk [vmem:[%s221 + $0x10] sm:$0xff] %vm228, 0.0
        $region40: #{tpu_custom_call.1} parent=27 // pred_fallthru
          _
        %v232 = vld [vmem:[%s187] sm:$0xff]
        %v233 = vld [vmem:[%s187 + $0x8] sm:$0xff]
        %v234 = vld [vmem:[%s196] sm:$0xff]
        %v235 = vld [vmem:[%s196 + $0x8] sm:$0xff]
        %v236 = vlog2.pop %v232
        %v237 = vmul.f32 %v236, 0.6931472
        %v238 = vlog2.pop %v233
        %v239 = vmul.f32 %v238, 0.6931472
        %v240 = vmax.f32 %v237, -100.0
        %v241 = vmax.f32 %v239, -100.0
        %v242 = vsub.f32 1.0, %v232
        %v243 = vsub.f32 1.0, %v233
        %v244 = vlog2.pop %v242
        %v245 = vmul.f32 %v244, 0.6931472
        %v246 = vlog2.pop %v243
        %v247 = vmul.f32 %v246, 0.6931472
        %v248 = vmax.f32 %v245, -100.0
        %v249 = vmax.f32 %v247, -100.0
        %v250 = vmul.f32 %v234, %v240
        %v251 = vmul.f32 %v235, %v241
        %v252 = vsub.f32 1.0, %v234
        %v253 = vsub.f32 1.0, %v235
        %v254 = vmul.f32 %v252, %v248
        %v255 = vmul.f32 %v253, %v249
        %v256 = vadd.f32 %v250, %v254
        %v257 = vadd.f32 %v251, %v255
        %vm258 = vcmask 130048
        %v259 = vsel %vm258, %v234, 0.0
        %v260 = vsel %vm258, %v235, 0.0
        %v261 = vadd.f32 %v259, %v260
        %v262 = vadd.f32 %v261, 0.0
        %v263 = vsel %vm258, %v256, 0.0
        %v264 = vsel %vm258, %v257, 0.0
        %v265 = vadd.f32 %v263, %v264
        %v266 = vadd.f32 %v265, 0.0
        %v267 = vmul.f32 %v234, %v256
        %v268 = vmul.f32 %v235, %v257
        %v269 = vsel %vm258, %v267, 0.0
        %v270 = vsel %vm258, %v268, 0.0
        %v271 = vadd.f32 %v269, %v270
        %v272 = vadd.f32 %v271, 0.0
        %v273 = vld [vmem:[%s221] sm:$0xff]
        %v274 = vadd.f32 %v273, %v262
        %275 = vst.msk [vmem:[%s221] sm:$0xff] %vm258, %v274
        %s276 = scalar_lea.vmem %s221, 8 [#allocation7]
        %v277 = vld [vmem:[%s276] sm:$0xff]
        %v278 = vadd.f32 %v277, %v266
        %279 = vst.msk [vmem:[%s276] sm:$0xff] %vm258, %v278
        %s280 = scalar_lea.vmem %s221, 16 [#allocation7]
        %v281 = vld [vmem:[%s280] sm:$0xff]
        %v282 = vadd.f32 %v281, %v272
        %283 = vst.msk [vmem:[%s280] sm:$0xff] %vm258, %v282
        %s284 = sand.u32 %s98, 1
        %s285 = scalar_lea.sflag [#allocation4], %s284
        %s286 = sand.u32 %s98, 1
        %s287 = smul.addr %s286, 24
        %s288 = scalar_lea.vmem [#allocation7], %s287
        // Predicated region
        $region41: #{tpu_custom_call.1} parent=27 // pred_check
          %p289 = pneg %p108
        $region42: #{tpu_custom_call.1} parent=27 // pred_check_branch
          %291 = sbr.rel (%p289) target = $region44
        $region43: #{tpu_custom_call.1} parent=27 // pred_region
          %s293 = ssub.s32 384, 384
          %294 = vsyncadd %s285, %s293
          %s295 = smul.addr %s26, 3
          %s296 = smul.addr %s295, 128
          %s297 = scalar_lea.hbm %s2, %s296
          %s298 = sshll.u32 %s288, 4
          %s299 = int_to_ptr.vmem [resolvable:$true] %s298
          %304 = dma.vmem_to_hbm [thread:$0]  %s299, 384, %s297, %s285, 128, 128, 8
        $region44: #{tpu_custom_call.1} parent=27 // pred_fallthru
          _
      $region28: #{tpu_custom_call.1} parent=5 // pred_fallthru
        _
      %p305 = scmp.le.s32.totalorder 2, %s17
      // Predicated region
      $region45: #{tpu_custom_call.1} parent=5 // pred_check
        %p306 = pneg %p305
      $region46: #{tpu_custom_call.1} parent=5 // pred_check_branch
        %308 = sbr.rel (%p306) target = $region48
      $region47: #{tpu_custom_call.1} parent=5 // pred_region
        %s309 = ssub.s32 %s17, 2
        // Predicated region
        $region49: #{tpu_custom_call.1} parent=47 // pred_check
          %p310 = pneg %p114
        $region50: #{tpu_custom_call.1} parent=47 // pred_check_branch
          %312 = sbr.rel (%p310) target = $region52
        $region51: #{tpu_custom_call.1} parent=47 // pred_region
          %s313 = sand.u32 %s99, 1
          %s314 = scalar_lea.sflag [#allocation4], %s313
          %s315 = sand.u32 %s99, 1
          %s316 = smul.addr %s315, 24
          %s317 = scalar_lea.vmem [#allocation7], %s316
          %318 = dma.done %s314, 384
        $region52: #{tpu_custom_call.1} parent=47 // pred_fallthru
          _
      $region48: #{tpu_custom_call.1} parent=5 // pred_fallthru
        _
    $region6: #{tpu_custom_call.1} parent=1 // loop_footer
      %s21 = sadd.s32 1, %s17
    $region7: #{tpu_custom_call.1} parent=1 // loop_footer_branch
      %16 = sbr.rel target = $region3
    $region8: #{tpu_custom_call.1} parent=1 // loop_exit
      _
    %319 = vsyncpa [#allocation3], 1
    %s320 = scalar_lea.sflag [#allocation3], 1
    %321 = vsyncpa %s320, 1
    %322 = vsyncpa [#allocation6], 1
    %s323 = scalar_lea.sflag [#allocation6], 1
    %324 = vsyncpa %s323, 1
    %325 = vsyncpa [#allocation4], 1
    %s326 = scalar_lea.sflag [#allocation4], 1
    %327 = vsyncpa %s326, 1

</llo_original>
